<compile_context>
chip_gen: v5e
topology: v5e:2x2
jax: 0.10.0
libtpu: 0.0.40
codegen_flags: <defaults>
</compile_context>

<pallas_src>
import jax
import jax.numpy as jnp
from jax.experimental import pallas as pl
from jax.experimental.pallas import tpu as pltpu


def _copy_kernel(x_ref, o_ref):
    # Identity: a contiguous .view computes nothing; pass the tile through.
    o_ref[...] = x_ref[...]


# Per-buffer tile budget.  1 input + 1 output, double-buffered => ~4x this
# resident in VMEM: 16 MiB, under the 32 MiB scoped-VMEM default on
# v5e/v6e/v7x and well under physical VMEM on all three.
_TARGET_TILE_BYTES = 4 * 1024 * 1024
# Widest lane-dense flattening we will try (all multiples of 128 lanes).
_LANE_CANDIDATES = (8192, 4096, 2048, 1024, 512, 256, 128)


def _sublane_granule(dtype):
    """Sublane packing granule: 8 rows for f32, 16 for bf16/f16, 32 for int8/fp8."""
    itemsize = jnp.dtype(dtype).itemsize
    return max(8, 32 // max(1, itemsize))


def _pick_row_tile(R, L, itemsize, granule):
    """Largest granule-aligned row tile within the byte budget; prefer exact divisors."""
    max_rows = max(1, _TARGET_TILE_BYTES // (L * itemsize))
    tr = (max_rows // granule) * granule
    if tr == 0:
        tr = granule
    tr = min(R, tr)  # tr == R (full extent in that dim) is always legal.
    if R % tr == 0:
        return tr
    # Search downward for a granule-multiple exact divisor of R to avoid the
    # masked remainder block; give up quickly and use the cdiv path otherwise.
    cand = (tr // granule) * granule
    while cand >= granule:
        if R % cand == 0:
            return cand
        cand -= granule
    return tr  # remainder block handled by Pallas masking


def _pallas_identity_copy(flat):
    """Aliased identity copy of a lane-dense (R, L) slab through VMEM."""
    R, L = flat.shape
    itemsize = jnp.dtype(flat.dtype).itemsize
    granule = _sublane_granule(flat.dtype)

    tr = _pick_row_tile(R, L, itemsize, granule)
    grid = (pl.cdiv(R, tr),)

    return pl.pallas_call(
        _copy_kernel,
        out_shape=jax.ShapeDtypeStruct((R, L), flat.dtype),
        grid=grid,
        in_specs=[pl.BlockSpec((tr, L), lambda i: (i, 0))],
        out_specs=pl.BlockSpec((tr, L), lambda i: (i, 0)),
        # Output aliases the input buffer: no new HBM allocation, and in-place
        # (zero extra HBM round-trip) when the caller's jit donates the operand.
        input_output_aliases={0: 0},
        cost_estimate=pl.CostEstimate(
            flops=0,
            transcendentals=0,
            bytes_accessed=2 * R * L * itemsize,
        ),
        compiler_params=pltpu.CompilerParams(
            dimension_semantics=("parallel",),  # shard rows across v7x's 2 TCs
        ),
    )(flat)


def _resolve_shape(total, shape):
    """Resolve a single -1 wildcard like torch .view."""
    shape = list(shape)
    neg = [i for i, s in enumerate(shape) if s == -1]
    assert len(neg) <= 1, "view: at most one -1 allowed"
    if neg:
        known = 1
        for s in shape:
            if s != -1:
                known *= s
        shape[neg[0]] = total // known
    out_total = 1
    for s in shape:
        out_total *= s
    assert out_total == total, "view: element count mismatch"
    return tuple(shape)


def view(x, shape):
    """Pallas-backed equivalent of torch `x.view(*shape)` (contiguous input)."""
    total = x.size
    out_shape = _resolve_shape(total, shape)

    # Pick the widest lane-dense flattening (last dim a large multiple of 128).
    lane = None
    for cand in _LANE_CANDIDATES:
        if total > 0 and total % cand == 0:
            lane = cand
            break

    if lane is None:
        # Tiny / awkward element counts (not a multiple of 128): a contiguous
        # view is metadata-only anyway, so skip the kernel entirely.
        # TODO(synk): no lane-dense tiling exists when total % 128 != 0.
        return jnp.reshape(x, out_shape)

    flat = jnp.reshape(x, (total // lane, lane))  # metadata-only C-order flatten
    copied = _pallas_identity_copy(flat)
    return jnp.reshape(copied, out_shape)         # metadata-only relabeling


class View:
    """Mirror of the PyTorch nn.Module."""

    def __init__(self, shape):
        self.shape = tuple(shape)

    def __call__(self, x):
        return view(x, self.shape)


if __name__ == "__main__":
    key = jax.random.PRNGKey(0)
    # Typical use: flatten conv features for an FC head.
    x = jax.random.normal(key, (2, 4, 16, 16), dtype=jnp.float32)  # NCHW

    # Reference (computed before the kernel call; same C-order as torch.view).
    ref = jnp.reshape(x, (2, 1024))

    mod = View((2, -1))  # -> (2, 1024)
    out = jax.block_until_ready(mod(x))

    assert out.shape == (2, 1024)
    assert out.dtype == x.dtype
    assert bool(jnp.array_equal(out, ref))

    print("KERNEL_OK")
</pallas_src>

<mosaic_0001>
module attributes {stable_mosaic.version = 11 : i64} {
  func.func @_copy_kernel(%arg0: i32, %arg1: memref<1x2048xf32, #tpu.memory_space<vmem>>, %arg2: memref<1x2048xf32, #tpu.memory_space<vmem>>) attributes {dimension_semantics = [#tpu.dimension_semantics<parallel>], iteration_bounds = array<i64: 1>, scalar_prefetch = 0 : i64, scratch_operands = 0 : i64, tpu.core_type = #tpu.core_type<tc>, window_params = [{transform_indices = @transform_0, window_bounds = array<i64: 1, 2048>}, {transform_indices = @transform_1, window_bounds = array<i64: 1, 2048>}]} {
    %c0 = arith.constant 0 : index
    %c0_0 = arith.constant 0 : index
    %0 = vector.load %arg1[%c0, %c0_0] : memref<1x2048xf32, #tpu.memory_space<vmem>>, vector<1x2048xf32>
    %c0_1 = arith.constant 0 : index
    %c0_2 = arith.constant 0 : index
    %1 = vector.load %arg2[%c0_1, %c0_2] : memref<1x2048xf32, #tpu.memory_space<vmem>>, vector<1x2048xf32>
    tpu.vector_store %arg2[%c0_1, %c0_2], %0 {strides = array<i32>} : memref<1x2048xf32, #tpu.memory_space<vmem>>, vector<1x2048xf32>,
    return
  }
  func.func @transform_0(%arg0: i32) -> (i32, i32) {
    %c0_i32 = arith.constant 0 : i32
    %c0_i32_0 = arith.constant 0 : i32
    return %arg0, %c0_i32 : i32, i32
  }
  func.func @transform_1(%arg0: i32) -> (i32, i32) {
    %c0_i32 = arith.constant 0 : i32
    %c0_i32_0 = arith.constant 0 : i32
    return %arg0, %c0_i32 : i32, i32
  }
}

</mosaic_0001>

<llo_original>
// kernel: tpu_custom_call.1
$region0: #{tpu_custom_call.1}
  #allocation0 [shape = 'u32[]', space=smem, size = 0x4, offset = 0x4, fixed_abs, tag = 'smem constant byte address 0x4 - core index']
  #allocation1 [shape = 'u32[72,128]{1,0:T(1,128)}', space=vmem, size = 0x9000, scoped, tag = 'internal scratch']
  %s0 = inlined_call_operand.hbm [shape: f32[1,2048], index: 0, kind: input, shape index: {}, may-alias: {0,1}]
  %s1 = inlined_call_operand.hbm [shape: f32[1,2048], index: 1, kind: output, shape index: {}, may-alias: {0,1}]
  %s2 = sld [smem:[#allocation0]]
  $region18: #{tpu_custom_call.1} parent=0
    _
  %s4 = ssub.s32 1, %s2
  %s5 = scalar_select 0, %s4, %s2
  $region1: #{tpu_custom_call.1} parent=0
    #allocation2 [shape = 'u8[8192]{0}', space=vmem, size = 0x2000, scoped, tag = 'input window, operand 0, single buffered']
    #allocation3 [shape = 's32[1]{0}', space=sflag, size = 0x4, scoped, tag = 'scoped memory for tpu_custom_call.1']
    #allocation4 [shape = 's32[1]{0}', space=sflag, size = 0x4, scoped, tag = 'scoped memory for tpu_custom_call.1']
    #allocation5 [shape = 'u8[8192]{0}', space=vmem, size = 0x2000, scoped, tag = 'output window, operand 0, single buffered']
    %6 = vsyncpa [#allocation3], 0
    %7 = vsyncpa [#allocation4], 0
    // Predicated region
    $region2: #{tpu_custom_call.1} parent=1 // pred_check
      _
    $region3: #{tpu_custom_call.1} parent=1 // pred_check_branch
      %9 = sbr.rel (0) target = $region5
    $region4: #{tpu_custom_call.1} parent=1 // pred_region
      %11 = vsyncadd [#allocation3], 0
      %s13 = sshll.u32 %s0, 4
      %s14 = int_to_ptr.hbm [resolvable:$true] %s13
      %s15 = sshll.u32 [#allocation2], 4
      %s16 = int_to_ptr.vmem [resolvable:$true] %s15
      %18 = dma.hbm_to_vmem [thread:$0]  %s14, 256, %s16, [#allocation3]
    $region5: #{tpu_custom_call.1} parent=1 // pred_fallthru
      _
    // Predicated region
    $region6: #{tpu_custom_call.1} parent=1 // pred_check
      _
    $region7: #{tpu_custom_call.1} parent=1 // pred_check_branch
      %20 = sbr.rel (0) target = $region9
    $region8: #{tpu_custom_call.1} parent=1 // pred_region
      %22 = dma.done [#allocation3], 256
    $region9: #{tpu_custom_call.1} parent=1 // pred_fallthru
      _
    %v23 = vld [vmem:[#allocation2] sm:$0xff]
    %v24 = vld [vmem:[#allocation2 + $0x8] sm:$0xff]
    %25 = vst [vmem:[#allocation5] sm:$0xff] %v23
    %26 = vst [vmem:[#allocation5 + $0x8] sm:$0xff] %v24
    // Predicated region
    $region10: #{tpu_custom_call.1} parent=1 // pred_check
      _
    $region11: #{tpu_custom_call.1} parent=1 // pred_check_branch
      %28 = sbr.rel (0) target = $region13
    $region12: #{tpu_custom_call.1} parent=1 // pred_region
      %30 = vsyncadd [#allocation4], 0
      %s32 = sshll.u32 [#allocation5], 4
      %s33 = int_to_ptr.vmem [resolvable:$true] %s32
      %s34 = sshll.u32 %s1, 4
      %s35 = int_to_ptr.hbm [resolvable:$true] %s34
      %37 = dma.vmem_to_hbm [thread:$0]  %s33, 256, %s35, [#allocation4]
    $region13: #{tpu_custom_call.1} parent=1 // pred_fallthru
      _
    // Predicated region
    $region14: #{tpu_custom_call.1} parent=1 // pred_check
      _
    $region15: #{tpu_custom_call.1} parent=1 // pred_check_branch
      %39 = sbr.rel (0) target = $region17
    $region16: #{tpu_custom_call.1} parent=1 // pred_region
      %41 = dma.done [#allocation4], 256
    $region17: #{tpu_custom_call.1} parent=1 // pred_fallthru
      _
    %42 = vsyncpa [#allocation3], 1
    %43 = vsyncpa [#allocation4], 1

</llo_original>
